<compile_context>
chip_gen: v7x
topology: tpu7x:2x2x1
jax: 0.10.0
libtpu: 0.0.40
codegen_flags: <defaults>
</compile_context>

<pallas_src>
import functools

import numpy as np
import jax
import jax.numpy as jnp
from jax.experimental import pallas as pl
from jax.experimental.pallas import tpu as pltpu

ALIGN_CORNERS = False          # stand-in for modelGLOBAL.torch_align_corners()
_MM_DTYPE = jnp.float32        # see header: bf16 only if matmul-bound on v6e/v7x


def _tpu_vmem_capacity_bytes():
    """Physical VMEM per core; conservative 64 MiB (v7x-sized) fallback."""
    try:
        info = pltpu.get_tpu_info()
        for name in ("vmem_capacity_bytes", "vmem_size_bytes", "vmem_bytes"):
            v = getattr(info, name, None)
            if isinstance(v, (int, np.integer)) and int(v) > 0:
                return int(v)
    except Exception:
        pass
    return 64 * 1024 * 1024


_VMEM_CAP = _tpu_vmem_capacity_bytes()
# Scoped VMEM we request from Mosaic: half of physical, clamped to [32, 96] MiB.
#   v5e/v6e (128 MiB) -> 64 MiB;  v7x (64 MiB) or unknown -> 32 MiB.
_VMEM_LIMIT_BYTES = int(min(max(_VMEM_CAP // 2, 32 * 1024 * 1024),
                            96 * 1024 * 1024))
# Budget for one x block (Pallas double-buffers it; accumulator, weights and
# the double-buffered output block share the remaining headroom).
_X_BLOCK_BUDGET = _VMEM_LIMIT_BYTES // 8
_KRON_BYTES_MAX = min(4 * 1024 * 1024, _X_BLOCK_BUDGET)


def _bilinear_matrix_np(n_in, n_out, align_corners):
    """1-D bilinear interpolation matrix M (n_out, n_in): y = M @ x (PyTorch rules)."""
    out_idx = np.arange(n_out, dtype=np.float64)
    if align_corners:
        src = out_idx * ((n_in - 1) / (n_out - 1)) if n_out > 1 else np.zeros(n_out)
    else:
        src = (out_idx + 0.5) * (n_in / n_out) - 0.5
    src = np.clip(src, 0.0, n_in - 1)
    lo = np.floor(src).astype(np.int64)
    hi = np.minimum(lo + 1, n_in - 1)
    w_hi = src - lo
    m = np.zeros((n_out, n_in), dtype=np.float64)
    m[np.arange(n_out), lo] += 1.0 - w_hi
    m[np.arange(n_out), hi] += w_hi
    return m


def _largest_divisor_leq(n, cap):
    cap = max(1, min(n, cap))
    for d in range(cap, 0, -1):
        if n % d == 0:
            return d
    return 1


def _choose_batch_tile(batch, bytes_per_item):
    """Largest batch tile that fits the block budget while keeping >=2
    'parallel' grid steps (so both v7x TensorCores get work; near-free on
    single-TC v5e/v6e)."""
    cap = max(1, _X_BLOCK_BUDGET // max(1, bytes_per_item))
    if batch >= 2:
        cap = min(cap, batch // 2)
    return _largest_divisor_leq(batch, cap)


def _choose_channel_tile_aligned(c, elem_cap):
    """Channel tile for blocks where ct is the 2nd-minor dim: must be a
    multiple of 8 (sublane-aligned) or the full C."""
    elem_cap = max(1, elem_cap)
    if c <= elem_cap:
        return c
    aligned = [d for d in range(8, c, 8) if c % d == 0]
    fitting = [d for d in aligned if d <= elem_cap]
    if fitting:
        return max(fitting)
    if aligned:
        return min(aligned)   # over nominal budget; VMEM limit has ~8x headroom
    return c                  # no aligned divisor at all -> full dim (always legal)


def _const_block_spec(block_shape, index_map):
    """BlockSpec for a block whose index never changes: single-buffer it so the
    second pipeline buffer's VMEM is not wasted."""
    try:
        return pl.BlockSpec(block_shape, index_map, pipeline_mode=pl.Buffered(1))
    except TypeError:          # BlockSpec without pipeline_mode support
        return pl.BlockSpec(block_shape, index_map)


# ----------------------------------------------------------------------------
# In-kernel matmul helpers (trace-time shape decisions).
# ----------------------------------------------------------------------------
def _mm_collapse(x3, w2):
    """(b, m, k) @ (k, n) -> (b, m, n).  One 2-D MXU matmul with M = b*m when
    the leading dims merge cleanly onto sublanes; otherwise a batched matmul
    with an in-VMEM broadcast of the (small) weight."""
    b, m, k = x3.shape
    n = w2.shape[1]
    if b == 1 or m % 8 == 0:
        y = jnp.dot(x3.reshape(b * m, k), w2, preferred_element_type=jnp.float32)
        return y.reshape(b, m, n)
    w_b = jnp.broadcast_to(w2[None], (b, k, n))
    return jnp.einsum('bmk,bkn->bmn', x3, w_b, preferred_element_type=jnp.float32)


def _mm_left(w2, x3):
    """(m, k) @ (b, k, n) -> (b, m, n).  Weight broadcast happens once per
    finalize in VMEM (not per C step, no HBM / double-buffer blow-up)."""
    b = x3.shape[0]
    w_b = jnp.broadcast_to(w2[None], (b,) + w2.shape)
    return jnp.einsum('bmk,bkn->bmn', w_b, x3, preferred_element_type=jnp.float32)


# ----------------------------------------------------------------------------
# Path C: 0 in target_shape -> channel mean only (no interpolation matmuls).
# ----------------------------------------------------------------------------
def _mean_only_call(x, dtype):
    B, C, H, W = x.shape
    hw = H * W
    item = x.dtype.itemsize
    ct = _choose_channel_tile_aligned(C, _X_BLOCK_BUDGET // max(1, hw * item))
    bytes_per_item = ct * hw * item + hw * 4 + hw * np.dtype(dtype).itemsize
    bt = _choose_batch_tile(B, bytes_per_item)
    inv_c = 1.0 / C
    xr = x.reshape(B, C, hw)            # pure view in HBM: lane-dense last dim

    def kernel(x_ref, o_ref, acc_ref):
        k = pl.program_id(1)

        @pl.when(k == 0)
        def _():
            acc_ref[...] = jnp.zeros_like(acc_ref)

        acc_ref[...] += jnp.sum(x_ref[...].astype(jnp.float32), axis=1)

        @pl.when(k == pl.num_programs(1) - 1)
        def _():
            o_ref[:, 0, :] = (acc_ref[...] * inv_c).astype(o_ref.dtype)

    out = pl.pallas_call(
        kernel,
        out_shape=jax.ShapeDtypeStruct((B, 1, hw), dtype),
        grid_spec=pltpu.PrefetchScalarGridSpec(
            num_scalar_prefetch=0,
            grid=(B // bt, C // ct),
            in_specs=[pl.BlockSpec((bt, ct, hw), lambda i, k: (i, k, 0))],
            out_specs=pl.BlockSpec((bt, 1, hw), lambda i, k: (i, 0, 0)),
            scratch_shapes=[pltpu.VMEM((bt, hw), jnp.float32)],
        ),
        compiler_params=pltpu.CompilerParams(
            dimension_semantics=("parallel", "arbitrary"),
            vmem_limit_bytes=_VMEM_LIMIT_BYTES),
    )(xr)
    return out.reshape(B, 1, H, W)


# ----------------------------------------------------------------------------
# Path B: small spatial dims -> fused lane-dense kron kernel (one matmul).
# ----------------------------------------------------------------------------
def _kron_call(x, h_out, w_out, align_corners, dtype):
    B, C, H, W = x.shape
    hw, howo = H * W, h_out * w_out
    item = x.dtype.itemsize
    a = _bilinear_matrix_np(H, h_out, align_corners) / C       # fold 1/C into A
    b = _bilinear_matrix_np(W, w_out, align_corners)
    kt = jnp.asarray(np.kron(a, b).T, dtype=jnp.float32)        # (H*W, Ho*Wo)
    bytes_per_item = C * hw * item + hw * 4 + howo * (4 + np.dtype(dtype).itemsize)
    bt = _choose_batch_tile(B, bytes_per_item)
    xr = x.reshape(B, C, hw)            # pure view in HBM: lane-dense last dim

    def kernel(x_ref, kt_ref, o_ref):
        s = jnp.sum(x_ref[...].astype(jnp.float32), axis=1)      # (bt, H*W)
        y = jnp.dot(s.astype(_MM_DTYPE), kt_ref[...].astype(_MM_DTYPE),
                    preferred_element_type=jnp.float32)          # (bt, Ho*Wo)
        o_ref[:, 0, :] = y.astype(o_ref.dtype)                   # lane-dense store

    out = pl.pallas_call(
        kernel,
        out_shape=jax.ShapeDtypeStruct((B, 1, howo), dtype),
        grid_spec=pltpu.PrefetchScalarGridSpec(
            num_scalar_prefetch=0,
            grid=(B // bt,),
            in_specs=[pl.BlockSpec((bt, C, hw), lambda i: (i, 0, 0)),
                      _const_block_spec((hw, howo), lambda i: (0, 0))],
            out_specs=pl.BlockSpec((bt, 1, howo), lambda i: (i, 0, 0)),
        ),
        compiler_params=pltpu.CompilerParams(
            dimension_semantics=("parallel",),
            vmem_limit_bytes=_VMEM_LIMIT_BYTES),
    )(xr, kt)
    return out.reshape(B, 1, h_out, w_out)


# ----------------------------------------------------------------------------
# Path A: separable matmuls with 2-D weights + C-reduction grid axis.
# ----------------------------------------------------------------------------
def _separable_call(x, h_out, w_out, align_corners, dtype):
    B, C, H, W = x.shape
    item = x.dtype.itemsize
    a = _bilinear_matrix_np(H, h_out, align_corners) / C        # fold 1/C into A
    b = _bilinear_matrix_np(W, w_out, align_corners)
    am = jnp.asarray(a, jnp.float32)                            # (h_out, H)
    btm = jnp.asarray(b.T, jnp.float32)                         # (W, w_out)

    ct = _largest_divisor_leq(C, max(1, _X_BLOCK_BUDGET // (H * W * item)))
    bytes_per_item = (ct * H * W * item + H * W * 4
                      + h_out * w_out * (4 + np.dtype(dtype).itemsize))
    bt = _choose_batch_tile(B, bytes_per_item)

    # Statically pick the cheaper contraction order (per-image MXU flops).
    w_first = (H * W * w_out + h_out * H * w_out) <= (h_out * H * W + h_out * W * w_out)

    def kernel(x_ref, btm_ref, am_ref, o_ref, acc_ref):
        k = pl.program_id(1)

        @pl.when(k == 0)
        def _():
            acc_ref[...] = jnp.zeros_like(acc_ref)

        acc_ref[...] += jnp.sum(x_ref[...].astype(jnp.float32), axis=1)  # (bt,H,W)

        @pl.when(k == pl.num_programs(1) - 1)
        def _():
            s = acc_ref[...].astype(_MM_DTYPE)          # (bt, H, W)
            amw = am_ref[...].astype(_MM_DTYPE)         # (h_out, H)
            btw = btm_ref[...].astype(_MM_DTYPE)        # (W, w_out)
            if w_first:
                t = _mm_collapse(s, btw)                # (bt, H, w_out)
                y = _mm_left(amw, t)                    # (bt, h_out, w_out)
            else:
                z = _mm_left(amw, s)                    # (bt, h_out, W)
                y = _mm_collapse(z, btw)                # (bt, h_out, w_out)
            # TODO(synk): when w_out < 128, flatten to a lane-dense
            # (bt, h_out*w_out) store to avoid masked vst.
            o_ref[...] = y.astype(o_ref.dtype)

    out = pl.pallas_call(
        kernel,
        out_shape=jax.ShapeDtypeStruct((B, h_out, w_out), dtype),
        grid_spec=pltpu.PrefetchScalarGridSpec(
            num_scalar_prefetch=0,
            grid=(B // bt, C // ct),
            in_specs=[
                pl.BlockSpec((bt, ct, H, W), lambda i, k: (i, k, 0, 0)),
                _const_block_spec((W, w_out), lambda i, k: (0, 0)),
                _const_block_spec((h_out, H), lambda i, k: (0, 0)),
            ],
            out_specs=pl.BlockSpec((bt, h_out, w_out), lambda i, k: (i, 0, 0)),
            scratch_shapes=[pltpu.VMEM((bt, H, W), jnp.float32)],
        ),
        compiler_params=pltpu.CompilerParams(
            dimension_semantics=("parallel", "arbitrary"),
            vmem_limit_bytes=_VMEM_LIMIT_BYTES),
    )(x, btm, am)
    return out.reshape(B, 1, h_out, w_out)


# ----------------------------------------------------------------------------
# Public entry point (== ClassifiedCostVolumeEpistemic.forward).
# ----------------------------------------------------------------------------
@functools.partial(jax.jit, static_argnames=("target_shape", "align_corners"))
def classified_cost_volume_epistemic(x, target_shape, align_corners=ALIGN_CORNERS):
    """x: (B, C, H, W); target_shape: (H_out, W_out). Returns (B, 1, H', W')."""
    B, C, H, W = x.shape
    th, tw = int(target_shape[0]), int(target_shape[1])
    dtype = x.dtype
    item = x.dtype.itemsize

    if th == 0 or tw == 0:
        # `0 in targetShape` case of the reference: skip interpolation,
        # channel mean only.
        return _mean_only_call(x, dtype)

    use_kron = (min(W, tw) < 128
                and H * W * th * tw * 4 <= _KRON_BYTES_MAX
                and C * H * W * item <= 2 * _X_BLOCK_BUDGET)
    if use_kron:
        return _kron_call(x, th, tw, align_corners, dtype)
    return _separable_call(x, th, tw, align_corners, dtype)


# ----------------------------------------------------------------------------
# Pure-JAX reference for self-checking.
# ----------------------------------------------------------------------------
def _reference(x, target_shape, align_corners=ALIGN_CORNERS):
    B, C, H, W = x.shape
    th, tw = target_shape
    if th == 0 or tw == 0:
        y = x
    else:
        a = jnp.asarray(_bilinear_matrix_np(H, th, align_corners), jnp.float32)
        b = jnp.asarray(_bilinear_matrix_np(W, tw, align_corners), jnp.float32)
        y = jnp.einsum('uh,bchw,vw->bcuv', a, x, b)
    return jnp.mean(y, axis=1, keepdims=True)


if __name__ == "__main__":
    key = jax.random.PRNGKey(0)
    k1, k2 = jax.random.split(key)

    # Small-spatial path (fused kron kernel): canonical module shapes.
    B, C, H, W = 2, 4, 16, 16
    target = (32, 32)
    x = jax.random.normal(k1, (B, C, H, W), dtype=jnp.float32)
    out = jax.block_until_ready(
        classified_cost_volume_epistemic(x, target_shape=target))
    ref = _reference(x, target)
    assert out.shape == (B, 1) + target, out.shape
    assert jnp.allclose(out, ref, atol=1e-4, rtol=1e-4), \
        float(jnp.max(jnp.abs(out - ref)))

    # Lane-dense path (separable matmuls + C-reduction grid axis).
    x2 = jax.random.normal(k2, (2, 4, 8, 128), dtype=jnp.float32)
    target2 = (16, 256)
    out2 = jax.block_until_ready(
        classified_cost_volume_epistemic(x2, target_shape=target2))
    ref2 = _reference(x2, target2)
    assert out2.shape == (2, 1) + target2, out2.shape
    assert jnp.allclose(out2, ref2, atol=1e-4, rtol=1e-4), \
        float(jnp.max(jnp.abs(out2 - ref2)))

    # `0 in targetShape` branch: channel mean only, no matmuls.
    out3 = jax.block_until_ready(
        classified_cost_volume_epistemic(x, target_shape=(0, 0)))
    ref3 = jnp.mean(x, axis=1, keepdims=True)
    assert out3.shape == (B, 1, H, W), out3.shape
    assert jnp.allclose(out3, ref3, atol=1e-5, rtol=1e-5), \
        float(jnp.max(jnp.abs(out3 - ref3)))

    print("KERNEL_OK")
</pallas_src>

<mosaic_0001>
module attributes {stable_mosaic.version = 11 : i64} {
  func.func @kernel(%arg0: i32, %arg1: memref<1x4x256xf32, #tpu.memory_space<vmem>>, %arg2: memref<256x1024xf32, #tpu.memory_space<vmem>>, %arg3: memref<1x1x1024xf32, #tpu.memory_space<vmem>>) attributes {dimension_semantics = [#tpu.dimension_semantics<parallel>], iteration_bounds = array<i64: 2>, scalar_prefetch = 0 : i64, scratch_operands = 0 : i64, tpu.core_type = #tpu.core_type<tc>, window_params = [{transform_indices = @transform_0, window_bounds = array<i64: 1, 4, 256>}, {pipeline_mode = #tpu.pipeline_mode<synchronous>, transform_indices = @transform_1, window_bounds = array<i64: 256, 1024>}, {transform_indices = @transform_2, window_bounds = array<i64: 1, 1, 1024>}]} {
    %c0 = arith.constant 0 : index
    %c0_0 = arith.constant 0 : index
    %c0_1 = arith.constant 0 : index
    %0 = vector.load %arg1[%c0, %c0_0, %c0_1] : memref<1x4x256xf32, #tpu.memory_space<vmem>>, vector<1x4x256xf32>
    %cst = arith.constant dense<0.000000e+00> : vector<1x256xf32>
    %1 = vector.multi_reduction <add>, %0, %cst [1] : vector<1x4x256xf32> to vector<1x256xf32>
    %c0_2 = arith.constant 0 : index
    %c0_3 = arith.constant 0 : index
    %2 = vector.load %arg2[%c0_2, %c0_3] : memref<256x1024xf32, #tpu.memory_space<vmem>>, vector<256x1024xf32>
    %cst_4 = arith.constant dense<0.000000e+00> : vector<1x1024xf32>
    %3 = tpu.matmul %1, %2, %cst_4 {dimension_numbers = #tpu.dot_dimension_numbers<[1], [0], [0], [1], [0, 0, 1, 1], [], []>} : vector<1x256xf32>, vector<256x1024xf32>, vector<1x1024xf32> -> vector<1x1024xf32>
    %c0_5 = arith.constant 0 : index
    %c0_6 = arith.constant 0 : index
    %c0_7 = arith.constant 0 : index
    %4 = vector.load %arg3[%c0_5, %c0_6, %c0_7] : memref<1x1x1024xf32, #tpu.memory_space<vmem>>, vector<1x1x1024xf32>
    %5 = vector.shape_cast %4 : vector<1x1x1024xf32> to vector<1x1024xf32>
    %6 = vector.shape_cast %3 : vector<1x1024xf32> to vector<1x1x1024xf32>
    tpu.vector_store %arg3[%c0_5, %c0_6, %c0_7], %6 {strides = array<i32>} : memref<1x1x1024xf32, #tpu.memory_space<vmem>>, vector<1x1x1024xf32>,
    return
  }
  func.func @transform_0(%arg0: i32) -> (i32, i32, i32) {
    %c0_i32 = arith.constant 0 : i32
    %c0_i32_0 = arith.constant 0 : i32
    %c0_i32_1 = arith.constant 0 : i32
    return %arg0, %c0_i32, %c0_i32_0 : i32, i32, i32
  }
  func.func @transform_1(%arg0: i32) -> (i32, i32) {
    %c0_i32 = arith.constant 0 : i32
    %c0_i32_0 = arith.constant 0 : i32
    %c0_i32_1 = arith.constant 0 : i32
    return %c0_i32, %c0_i32_0 : i32, i32
  }
  func.func @transform_2(%arg0: i32) -> (i32, i32, i32) {
    %c0_i32 = arith.constant 0 : i32
    %c0_i32_0 = arith.constant 0 : i32
    %c0_i32_1 = arith.constant 0 : i32
    return %arg0, %c0_i32, %c0_i32_0 : i32, i32, i32
  }
}

</mosaic_0001>

<llo_original>
// kernel: classified_cost_volume_epistemic.1
$region0: #{classified_cost_volume_epistemic.1}
  #allocation0 [shape = 'u32[]', space=smem, size = 0x4, offset = 0x4, fixed_abs, tag = 'smem constant byte address 0x4 - core index']
  #allocation1 [shape = 'u32[144,128]{1,0:T(1,128)}', space=vmem, size = 0x12000, scoped, tag = 'internal scratch']
  %s0 = inlined_call_operand.vmem [shape: f32[2,4,256], index: 0, kind: input, shape index: {}]
  %s1 = inlined_call_operand.hbm [shape: f32[256,1024], index: 1, kind: input, shape index: {}]
  %s2 = inlined_call_operand.vmem [shape: f32[2,1,1024], index: 2, kind: output, shape index: {}]
  %s3 = sld [smem:[#allocation0]]
  $region45: #{classified_cost_volume_epistemic.1} parent=0
    _
  %s5 = ssub.s32 1, %s3
  %s6 = scalar_select 0, %s5, %s3
  $region1: #{classified_cost_volume_epistemic.1} parent=0
    #allocation2 [shape = 'u8[1048576]{0}', space=vmem, size = 0x100000, scoped, tag = 'input window, operand 1, single buffered']
    #allocation3 [shape = 's32[2]{0}', space=sflag, size = 0x8, scoped, tag = 'scoped memory for classified_cost_volume_epistemic.1']
    %7 = vsyncpa [#allocation3], 0
    loop: start=0, step=1, limit=4
    $region2: #{classified_cost_volume_epistemic.1} parent=1 // loop_pre_header
      _
    $region3: #{classified_cost_volume_epistemic.1} parent=1 // loop_header
      %s9 = sphi 0, %s13
      %p10 = scmp.ge.s32.totalorder %s9, 4
      %s19 = sphi 0, %s21
      %s22 = sphi 0, %s19
      %s23 = sphi 0, %s22
      %s39 = sphi 0, %s23
      %s43 = sphi 0, %s43
      %s45 = sphi 0, %s43
      %s46 = sphi 0, %s45
      %s60 = sphi 0, %s46
      %s66 = sphi 0, %s68
      %s69 = sphi 0, %s66
      %s70 = sphi 0, %s69
      %s86 = sphi 0, %s70
    $region4: #{classified_cost_volume_epistemic.1} parent=1 // loop_header_branch
      %12 = sbr.rel (%p10) target = $region8
    $region5: #{classified_cost_volume_epistemic.1} parent=1 // loop_body
      %s14 = ssub.s32 %s9, 1
      %s15 = ssub.s32 %s9, 2
      %s16 = sadd.s32 %s9, 1
      %s17 = ssub.s32 %s9, %s16
      %p18 = scmp.eq.s32.totalorder %s17, 0
      %s20 = sadd.s32 %s19, 1
      %s21 = scalar_select %p18, %s19, %s20
      %p24 = pneg %p18
      %p25 = scmp.eq.s32.totalorder %s9, 1
      %p26 = por %p24, %p25
      %p27 = scmp.ne.s32.totalorder %s19, %s22
      %p28 = scmp.eq.s32.totalorder %s9, 0
      %p29 = por %p27, %p28
      %p30 = scmp.ne.s32.totalorder %s19, %s22
      %p31 = scmp.eq.s32.totalorder %s14, 1
      %p32 = por %p30, %p31
      %p33 = scmp.ne.s32.totalorder %s22, %s23
      %p34 = scmp.eq.s32.totalorder %s14, 0
      %p35 = por %p33, %p34
      %p36 = scmp.ne.s32.totalorder %s22, %s23
      %p37 = scmp.eq.s32.totalorder %s15, 1
      %p38 = por %p36, %p37
      %p40 = scmp.ne.s32.totalorder %s23, %s39
      %p41 = scmp.eq.s32.totalorder %s15, 0
      %p42 = por %p40, %p41
      %s44 = sadd.s32 %s43, 1
      %p47 = scmp.eq.s32.totalorder %s9, 1
      %p48 = scmp.ne.s32.totalorder %s43, %s45
      %p49 = scmp.eq.s32.totalorder %s9, 0
      %p50 = por %p48, %p49
      %p51 = scmp.ne.s32.totalorder %s43, %s45
      %p52 = scmp.eq.s32.totalorder %s14, 1
      %p53 = por %p51, %p52
      %p54 = scmp.ne.s32.totalorder %s45, %s46
      %p55 = scmp.eq.s32.totalorder %s14, 0
      %p56 = por %p54, %p55
      %p57 = scmp.ne.s32.totalorder %s45, %s46
      %p58 = scmp.eq.s32.totalorder %s15, 1
      %p59 = por %p57, %p58
      %p61 = scmp.ne.s32.totalorder %s46, %s60
      %p62 = scmp.eq.s32.totalorder %s15, 0
      %p63 = por %p61, %p62
      %s64 = ssub.s32 %s9, %s16
      %p65 = scmp.eq.s32.totalorder %s64, 0
      %s67 = sadd.s32 %s66, 1
      %s68 = scalar_select %p65, %s66, %s67
      %p71 = pneg %p65
      %p72 = scmp.eq.s32.totalorder %s9, 1
      %p73 = por %p71, %p72
      %p74 = scmp.ne.s32.totalorder %s66, %s69
      %p75 = scmp.eq.s32.totalorder %s9, 0
      %p76 = por %p74, %p75
      %p77 = scmp.ne.s32.totalorder %s66, %s69
      %p78 = scmp.eq.s32.totalorder %s14, 1
      %p79 = por %p77, %p78
      %p80 = scmp.ne.s32.totalorder %s69, %s70
      %p81 = scmp.eq.s32.totalorder %s14, 0
      %p82 = por %p80, %p81
      %p83 = scmp.ne.s32.totalorder %s69, %s70
      %p84 = scmp.eq.s32.totalorder %s15, 1
      %p85 = por %p83, %p84
      %p87 = scmp.ne.s32.totalorder %s70, %s86
      %p88 = scmp.eq.s32.totalorder %s15, 0
      %p89 = por %p87, %p88
      %p90 = scmp.le.s32.totalorder 1, %s9
      %p91 = scmp.lt.s32.totalorder %s9, 3
      %p92 = pnand %p90, %p91
      %p93 = pneg %p92
      // Predicated region
      $region9: #{classified_cost_volume_epistemic.1} parent=5 // pred_check
        _
      $region10: #{classified_cost_volume_epistemic.1} parent=5 // pred_check_branch
        %95 = sbr.rel (%p92) target = $region12
      $region11: #{classified_cost_volume_epistemic.1} parent=5 // pred_region
        %s96 = ssub.s32 %s9, 1
        // Predicated region
        $region13: #{classified_cost_volume_epistemic.1} parent=11 // pred_check
          %p97 = pneg %p56
        $region14: #{classified_cost_volume_epistemic.1} parent=11 // pred_check_branch
          %99 = sbr.rel (%p97) target = $region16
        $region15: #{classified_cost_volume_epistemic.1} parent=11 // pred_region
          %s101 = ssub.s32 32768, 32768
          %102 = vsyncadd [#allocation3], %s101
          %s103 = sshll.u32 [#allocation2], 4
          %s104 = int_to_ptr.vmem [resolvable:$true] %s103
          %109 = dma.hbm_to_vmem [thread:$0]  %s1, 32768, %s104, [#allocation3], 1024, 1024, 64
        $region16: #{classified_cost_volume_epistemic.1} parent=11 // pred_fallthru
          _
      $region12: #{classified_cost_volume_epistemic.1} parent=5 // pred_fallthru
        _
      %p110 = scmp.lt.s32.totalorder %s9, 2
      // Predicated region
      $region17: #{classified_cost_volume_epistemic.1} parent=5 // pred_check
        %p111 = pneg %p110
      $region18: #{classified_cost_volume_epistemic.1} parent=5 // pred_check_branch
        %113 = sbr.rel (%p111) target = $region20
      $region19: #{classified_cost_volume_epistemic.1} parent=5 // pred_region
        // Predicated region
        $region21: #{classified_cost_volume_epistemic.1} parent=19 // pred_check
          %p114 = pneg %p29
        $region22: #{classified_cost_volume_epistemic.1} parent=19 // pred_check_branch
          %116 = sbr.rel (%p114) target = $region24
        $region23: #{classified_cost_volume_epistemic.1} parent=19 // pred_region
          %p117 = scmp.lt.s32.totalorder %s9, 1
          %s118 = scalar_select %p117, %s9, 1
          %s119 = smul.addr %s118, 2
          %s120 = smul.addr %s119, 4
          %s121 = scalar_lea.vmem %s0, %s120
        $region24: #{classified_cost_volume_epistemic.1} parent=19 // pred_fallthru
          _
      $region20: #{classified_cost_volume_epistemic.1} parent=5 // pred_fallthru
        _
      %p122 = scmp.le.s32.totalorder 1, %s9
      %p123 = scmp.lt.s32.totalorder %s9, 3
      %p124 = pnand %p122, %p123
      %p125 = pneg %p124
      // Predicated region
      $region25: #{classified_cost_volume_epistemic.1} parent=5 // pred_check
        _
      $region26: #{classified_cost_volume_epistemic.1} parent=5 // pred_check_branch
        %127 = sbr.rel (%p124) target = $region28
      $region27: #{classified_cost_volume_epistemic.1} parent=5 // pred_region
        %s128 = ssub.s32 %s9, 1
        // Predicated region
        $region29: #{classified_cost_volume_epistemic.1} parent=27 // pred_check
          %p129 = pneg %p56
        $region30: #{classified_cost_volume_epistemic.1} parent=27 // pred_check_branch
          %131 = sbr.rel (%p129) target = $region32
        $region31: #{classified_cost_volume_epistemic.1} parent=27 // pred_region
          %132 = dma.done [#allocation3], 32768
        $region32: #{classified_cost_volume_epistemic.1} parent=27 // pred_fallthru
          _
        %p133 = scmp.lt.s32.totalorder %s14, 1
        %s134 = scalar_select %p133, %s14, 1
        %s135 = smul.addr %s134, 2
        %s136 = smul.addr %s135, 4
        %s137 = scalar_lea.vmem %s0, %s136
        %p138 = pneg %p35
        %p139 = pneg %p32
        %p140 = pneg %p56
        %p141 = pneg %p53
        %p142 = pneg %p82
        %p143 = pneg %p79
        %p144 = scmp.lt.s32.totalorder %s14, 1
        %s145 = scalar_select %p144, %s14, 1
        %s146 = smul.addr %s145, 8
        %s147 = scalar_lea.vmem %s2, %s146
        %p148 = scmp.lt.s32.totalorder %s14, 1
        %s149 = scalar_select %p148, %s14, 1
        %s150 = smul.addr %s149, 2
        %s151 = smul.addr %s150, 4
        %s152 = scalar_lea.vmem %s0, %s151
        %p153 = scmp.lt.s32.totalorder %s14, 1
        %s154 = scalar_select %p153, %s14, 1
        %s155 = smul.addr %s154, 8
        %s156 = scalar_lea.vmem %s2, %s155
        %v157 = vld [vmem:[%s152] sm:$0xff]
        %v159 = vcombine.high %v157, %v157
        %vm161 = vcmask 1043456
        %v162 = vsel %vm161, %v157, 0.0
        %v163 = vrot.slane %v162, 4
        %v164 = vadd.f32 %v162, %v163
        %v165 = vrot.slane %v164, 2
        %v166 = vadd.f32 %v164, %v165
        %v167 = vrot.slane %v166, 1
        %v168 = vadd.f32 %v166, %v167
        %v169 = vsel %vm161, %v159, 0.0
        %v170 = vrot.slane %v169, 4
        %v171 = vadd.f32 %v169, %v170
        %v172 = vrot.slane %v171, 2
        %v173 = vadd.f32 %v171, %v172
        %v174 = vrot.slane %v173, 1
        %v175 = vadd.f32 %v173, %v174
        %v176 = vld [vmem:[#allocation2] sm:$0xff]
        %v177 = vld [vmem:[#allocation2 + $0x8] sm:$0xff]
        %v178 = vld [vmem:[#allocation2 + $0x10] sm:$0xff]
        %v179 = vld [vmem:[#allocation2 + $0x18] sm:$0xff]
        %v180 = vld [vmem:[#allocation2 + $0x20] sm:$0xff]
        %v181 = vld [vmem:[#allocation2 + $0x28] sm:$0xff]
        %v182 = vld [vmem:[#allocation2 + $0x30] sm:$0xff]
        %v183 = vld [vmem:[#allocation2 + $0x38] sm:$0xff]
        %v184 = vld [vmem:[#allocation2 + $0x40] sm:$0xff]
        %v185 = vld [vmem:[#allocation2 + $0x48] sm:$0xff]
        %v186 = vld [vmem:[#allocation2 + $0x50] sm:$0xff]
        %v187 = vld [vmem:[#allocation2 + $0x58] sm:$0xff]
        %v188 = vld [vmem:[#allocation2 + $0x60] sm:$0xff]
        %v189 = vld [vmem:[#allocation2 + $0x68] sm:$0xff]
        %v190 = vld [vmem:[#allocation2 + $0x70] sm:$0xff]
        %v191 = vld [vmem:[#allocation2 + $0x78] sm:$0xff]
        %v192 = vld [vmem:[#allocation2 + $0x80] sm:$0xff]
        %v193 = vld [vmem:[#allocation2 + $0x88] sm:$0xff]
        %v194 = vld [vmem:[#allocation2 + $0x90] sm:$0xff]
        %v195 = vld [vmem:[#allocation2 + $0x98] sm:$0xff]
        %v196 = vld [vmem:[#allocation2 + $0xa0] sm:$0xff]
        %v197 = vld [vmem:[#allocation2 + $0xa8] sm:$0xff]
        %v198 = vld [vmem:[#allocation2 + $0xb0] sm:$0xff]
        %v199 = vld [vmem:[#allocation2 + $0xb8] sm:$0xff]
        %v200 = vld [vmem:[#allocation2 + $0xc0] sm:$0xff]
        %v201 = vld [vmem:[#allocation2 + $0xc8] sm:$0xff]
        %v202 = vld [vmem:[#allocation2 + $0xd0] sm:$0xff]
        %v203 = vld [vmem:[#allocation2 + $0xd8] sm:$0xff]
        %v204 = vld [vmem:[#allocation2 + $0xe0] sm:$0xff]
        %v205 = vld [vmem:[#allocation2 + $0xe8] sm:$0xff]
        %v206 = vld [vmem:[#allocation2 + $0xf0] sm:$0xff]
        %v207 = vld [vmem:[#allocation2 + $0xf8] sm:$0xff]
        %v208 = vld [vmem:[#allocation2 + $0x100] sm:$0xff]
        %v209 = vld [vmem:[#allocation2 + $0x108] sm:$0xff]
        %v210 = vld [vmem:[#allocation2 + $0x110] sm:$0xff]
        %v211 = vld [vmem:[#allocation2 + $0x118] sm:$0xff]
        %v212 = vld [vmem:[#allocation2 + $0x120] sm:$0xff]
        %v213 = vld [vmem:[#allocation2 + $0x128] sm:$0xff]
        %v214 = vld [vmem:[#allocation2 + $0x130] sm:$0xff]
        %v215 = vld [vmem:[#allocation2 + $0x138] sm:$0xff]
        %v216 = vld [vmem:[#allocation2 + $0x140] sm:$0xff]
        %v217 = vld [vmem:[#allocation2 + $0x148] sm:$0xff]
        %v218 = vld [vmem:[#allocation2 + $0x150] sm:$0xff]
        %v219 = vld [vmem:[#allocation2 + $0x158] sm:$0xff]
        %v220 = vld [vmem:[#allocation2 + $0x160] sm:$0xff]
        %v221 = vld [vmem:[#allocation2 + $0x168] sm:$0xff]
        %v222 = vld [vmem:[#allocation2 + $0x170] sm:$0xff]
        %v223 = vld [vmem:[#allocation2 + $0x178] sm:$0xff]
        %v224 = vld [vmem:[#allocation2 + $0x180] sm:$0xff]
        %v225 = vld [vmem:[#allocation2 + $0x188] sm:$0xff]
        %v226 = vld [vmem:[#allocation2 + $0x190] sm:$0xff]
        %v227 = vld [vmem:[#allocation2 + $0x198] sm:$0xff]
        %v228 = vld [vmem:[#allocation2 + $0x1a0] sm:$0xff]
        %v229 = vld [vmem:[#allocation2 + $0x1a8] sm:$0xff]
        %v230 = vld [vmem:[#allocation2 + $0x1b0] sm:$0xff]
        %v231 = vld [vmem:[#allocation2 + $0x1b8] sm:$0xff]
        %v232 = vld [vmem:[#allocation2 + $0x1c0] sm:$0xff]
        %v233 = vld [vmem:[#allocation2 + $0x1c8] sm:$0xff]
        %v234 = vld [vmem:[#allocation2 + $0x1d0] sm:$0xff]
        %v235 = vld [vmem:[#allocation2 + $0x1d8] sm:$0xff]
        %v236 = vld [vmem:[#allocation2 + $0x1e0] sm:$0xff]
        %v237 = vld [vmem:[#allocation2 + $0x1e8] sm:$0xff]
        %v238 = vld [vmem:[#allocation2 + $0x1f0] sm:$0xff]
        %v239 = vld [vmem:[#allocation2 + $0x1f8] sm:$0xff]
        %v240 = vld [vmem:[#allocation2 + $0x200] sm:$0xff]
        %v241 = vld [vmem:[#allocation2 + $0x208] sm:$0xff]
        %v242 = vld [vmem:[#allocation2 + $0x210] sm:$0xff]
        %v243 = vld [vmem:[#allocation2 + $0x218] sm:$0xff]
        %v244 = vld [vmem:[#allocation2 + $0x220] sm:$0xff]
        %v245 = vld [vmem:[#allocation2 + $0x228] sm:$0xff]
        %v246 = vld [vmem:[#allocation2 + $0x230] sm:$0xff]
        %v247 = vld [vmem:[#allocation2 + $0x238] sm:$0xff]
        %v248 = vld [vmem:[#allocation2 + $0x240] sm:$0xff]
        %v249 = vld [vmem:[#allocation2 + $0x248] sm:$0xff]
        %v250 = vld [vmem:[#allocation2 + $0x250] sm:$0xff]
        %v251 = vld [vmem:[#allocation2 + $0x258] sm:$0xff]
        %v252 = vld [vmem:[#allocation2 + $0x260] sm:$0xff]
        %v253 = vld [vmem:[#allocation2 + $0x268] sm:$0xff]
        %v254 = vld [vmem:[#allocation2 + $0x270] sm:$0xff]
        %v255 = vld [vmem:[#allocation2 + $0x278] sm:$0xff]
        %v256 = vld [vmem:[#allocation2 + $0x280] sm:$0xff]
        %v257 = vld [vmem:[#allocation2 + $0x288] sm:$0xff]
        %v258 = vld [vmem:[#allocation2 + $0x290] sm:$0xff]
        %v259 = vld [vmem:[#allocation2 + $0x298] sm:$0xff]
        %v260 = vld [vmem:[#allocation2 + $0x2a0] sm:$0xff]
        %v261 = vld [vmem:[#allocation2 + $0x2a8] sm:$0xff]
        %v262 = vld [vmem:[#allocation2 + $0x2b0] sm:$0xff]
        %v263 = vld [vmem:[#allocation2 + $0x2b8] sm:$0xff]
        %v264 = vld [vmem:[#allocation2 + $0x2c0] sm:$0xff]
        %v265 = vld [vmem:[#allocation2 + $0x2c8] sm:$0xff]
        %v266 = vld [vmem:[#allocation2 + $0x2d0] sm:$0xff]
        %v267 = vld [vmem:[#allocation2 + $0x2d8] sm:$0xff]
        %v268 = vld [vmem:[#allocation2 + $0x2e0] sm:$0xff]
        %v269 = vld [vmem:[#allocation2 + $0x2e8] sm:$0xff]
        %v270 = vld [vmem:[#allocation2 + $0x2f0] sm:$0xff]
        %v271 = vld [vmem:[#allocation2 + $0x2f8] sm:$0xff]
        %v272 = vld [vmem:[#allocation2 + $0x300] sm:$0xff]
        %v273 = vld [vmem:[#allocation2 + $0x308] sm:$0xff]
        %v274 = vld [vmem:[#allocation2 + $0x310] sm:$0xff]
        %v275 = vld [vmem:[#allocation2 + $0x318] sm:$0xff]
        %v276 = vld [vmem:[#allocation2 + $0x320] sm:$0xff]
        %v277 = vld [vmem:[#allocation2 + $0x328] sm:$0xff]
        %v278 = vld [vmem:[#allocation2 + $0x330] sm:$0xff]
        %v279 = vld [vmem:[#allocation2 + $0x338] sm:$0xff]
        %v280 = vld [vmem:[#allocation2 + $0x340] sm:$0xff]
        %v281 = vld [vmem:[#allocation2 + $0x348] sm:$0xff]
        %v282 = vld [vmem:[#allocation2 + $0x350] sm:$0xff]
        %v283 = vld [vmem:[#allocation2 + $0x358] sm:$0xff]
        %v284 = vld [vmem:[#allocation2 + $0x360] sm:$0xff]
        %v285 = vld [vmem:[#allocation2 + $0x368] sm:$0xff]
        %v286 = vld [vmem:[#allocation2 + $0x370] sm:$0xff]
        %v287 = vld [vmem:[#allocation2 + $0x378] sm:$0xff]
        %v288 = vld [vmem:[#allocation2 + $0x380] sm:$0xff]
        %v289 = vld [vmem:[#allocation2 + $0x388] sm:$0xff]
        %v290 = vld [vmem:[#allocation2 + $0x390] sm:$0xff]
        %v291 = vld [vmem:[#allocation2 + $0x398] sm:$0xff]
        %v292 = vld [vmem:[#allocation2 + $0x3a0] sm:$0xff]
        %v293 = vld [vmem:[#allocation2 + $0x3a8] sm:$0xff]
        %v294 = vld [vmem:[#allocation2 + $0x3b0] sm:$0xff]
        %v295 = vld [vmem:[#allocation2 + $0x3b8] sm:$0xff]
        %v296 = vld [vmem:[#allocation2 + $0x3c0] sm:$0xff]
        %v297 = vld [vmem:[#allocation2 + $0x3c8] sm:$0xff]
        %v298 = vld [vmem:[#allocation2 + $0x3d0] sm:$0xff]
        %v299 = vld [vmem:[#allocation2 + $0x3d8] sm:$0xff]
        %v300 = vld [vmem:[#allocation2 + $0x3e0] sm:$0xff]
        %v301 = vld [vmem:[#allocation2 + $0x3e8] sm:$0xff]
        %v302 = vld [vmem:[#allocation2 + $0x3f0] sm:$0xff]
        %v303 = vld [vmem:[#allocation2 + $0x3f8] sm:$0xff]
        %v304 = vld [vmem:[#allocation2 + $0x400] sm:$0xff]
        %v305 = vld [vmem:[#allocation2 + $0x408] sm:$0xff]
        %v306 = vld [vmem:[#allocation2 + $0x410] sm:$0xff]
        %v307 = vld [vmem:[#allocation2 + $0x418] sm:$0xff]
        %v308 = vld [vmem:[#allocation2 + $0x420] sm:$0xff]
        %v309 = vld [vmem:[#allocation2 + $0x428] sm:$0xff]
        %v310 = vld [vmem:[#allocation2 + $0x430] sm:$0xff]
        %v311 = vld [vmem:[#allocation2 + $0x438] sm:$0xff]
        %v312 = vld [vmem:[#allocation2 + $0x440] sm:$0xff]
        %v313 = vld [vmem:[#allocation2 + $0x448] sm:$0xff]
        %v314 = vld [vmem:[#allocation2 + $0x450] sm:$0xff]
        %v315 = vld [vmem:[#allocation2 + $0x458] sm:$0xff]
        %v316 = vld [vmem:[#allocation2 + $0x460] sm:$0xff]
        %v317 = vld [vmem:[#allocation2 + $0x468] sm:$0xff]
        %v318 = vld [vmem:[#allocation2 + $0x470] sm:$0xff]
        %v319 = vld [vmem:[#allocation2 + $0x478] sm:$0xff]
        %v320 = vld [vmem:[#allocation2 + $0x480] sm:$0xff]
        %v321 = vld [vmem:[#allocation2 + $0x488] sm:$0xff]
        %v322 = vld [vmem:[#allocation2 + $0x490] sm:$0xff]
        %v323 = vld [vmem:[#allocation2 + $0x498] sm:$0xff]
        %v324 = vld [vmem:[#allocation2 + $0x4a0] sm:$0xff]
        %v325 = vld [vmem:[#allocation2 + $0x4a8] sm:$0xff]
        %v326 = vld [vmem:[#allocation2 + $0x4b0] sm:$0xff]
        %v327 = vld [vmem:[#allocation2 + $0x4b8] sm:$0xff]
        %v328 = vld [vmem:[#allocation2 + $0x4c0] sm:$0xff]
        %v329 = vld [vmem:[#allocation2 + $0x4c8] sm:$0xff]
        %v330 = vld [vmem:[#allocation2 + $0x4d0] sm:$0xff]
        %v331 = vld [vmem:[#allocation2 + $0x4d8] sm:$0xff]
        %v332 = vld [vmem:[#allocation2 + $0x4e0] sm:$0xff]
        %v333 = vld [vmem:[#allocation2 + $0x4e8] sm:$0xff]
        %v334 = vld [vmem:[#allocation2 + $0x4f0] sm:$0xff]
        %v335 = vld [vmem:[#allocation2 + $0x4f8] sm:$0xff]
        %v336 = vld [vmem:[#allocation2 + $0x500] sm:$0xff]
        %v337 = vld [vmem:[#allocation2 + $0x508] sm:$0xff]
        %v338 = vld [vmem:[#allocation2 + $0x510] sm:$0xff]
        %v339 = vld [vmem:[#allocation2 + $0x518] sm:$0xff]
        %v340 = vld [vmem:[#allocation2 + $0x520] sm:$0xff]
        %v341 = vld [vmem:[#allocation2 + $0x528] sm:$0xff]
        %v342 = vld [vmem:[#allocation2 + $0x530] sm:$0xff]
        %v343 = vld [vmem:[#allocation2 + $0x538] sm:$0xff]
        %v344 = vld [vmem:[#allocation2 + $0x540] sm:$0xff]
        %v345 = vld [vmem:[#allocation2 + $0x548] sm:$0xff]
        %v346 = vld [vmem:[#allocation2 + $0x550] sm:$0xff]
        %v347 = vld [vmem:[#allocation2 + $0x558] sm:$0xff]
        %v348 = vld [vmem:[#allocation2 + $0x560] sm:$0xff]
        %v349 = vld [vmem:[#allocation2 + $0x568] sm:$0xff]
        %v350 = vld [vmem:[#allocation2 + $0x570] sm:$0xff]
        %v351 = vld [vmem:[#allocation2 + $0x578] sm:$0xff]
        %v352 = vld [vmem:[#allocation2 + $0x580] sm:$0xff]
        %v353 = vld [vmem:[#allocation2 + $0x588] sm:$0xff]
        %v354 = vld [vmem:[#allocation2 + $0x590] sm:$0xff]
        %v355 = vld [vmem:[#allocation2 + $0x598] sm:$0xff]
        %v356 = vld [vmem:[#allocation2 + $0x5a0] sm:$0xff]
        %v357 = vld [vmem:[#allocation2 + $0x5a8] sm:$0xff]
        %v358 = vld [vmem:[#allocation2 + $0x5b0] sm:$0xff]
        %v359 = vld [vmem:[#allocation2 + $0x5b8] sm:$0xff]
        %v360 = vld [vmem:[#allocation2 + $0x5c0] sm:$0xff]
        %v361 = vld [vmem:[#allocation2 + $0x5c8] sm:$0xff]
        %v362 = vld [vmem:[#allocation2 + $0x5d0] sm:$0xff]
        %v363 = vld [vmem:[#allocation2 + $0x5d8] sm:$0xff]
        %v364 = vld [vmem:[#allocation2 + $0x5e0] sm:$0xff]
        %v365 = vld [vmem:[#allocation2 + $0x5e8] sm:$0xff]
        %v366 = vld [vmem:[#allocation2 + $0x5f0] sm:$0xff]
        %v367 = vld [vmem:[#allocation2 + $0x5f8] sm:$0xff]
        %v368 = vld [vmem:[#allocation2 + $0x600] sm:$0xff]
        %v369 = vld [vmem:[#allocation2 + $0x608] sm:$0xff]
        %v370 = vld [vmem:[#allocation2 + $0x610] sm:$0xff]
        %v371 = vld [vmem:[#allocation2 + $0x618] sm:$0xff]
        %v372 = vld [vmem:[#allocation2 + $0x620] sm:$0xff]
        %v373 = vld [vmem:[#allocation2 + $0x628] sm:$0xff]
        %v374 = vld [vmem:[#allocation2 + $0x630] sm:$0xff]
        %v375 = vld [vmem:[#allocation2 + $0x638] sm:$0xff]
        %v376 = vld [vmem:[#allocation2 + $0x640] sm:$0xff]
        %v377 = vld [vmem:[#allocation2 + $0x648] sm:$0xff]
        %v378 = vld [vmem:[#allocation2 + $0x650] sm:$0xff]
        %v379 = vld [vmem:[#allocation2 + $0x658] sm:$0xff]
        %v380 = vld [vmem:[#allocation2 + $0x660] sm:$0xff]
        %v381 = vld [vmem:[#allocation2 + $0x668] sm:$0xff]
        %v382 = vld [vmem:[#allocation2 + $0x670] sm:$0xff]
        %v383 = vld [vmem:[#allocation2 + $0x678] sm:$0xff]
        %v384 = vld [vmem:[#allocation2 + $0x680] sm:$0xff]
        %v385 = vld [vmem:[#allocation2 + $0x688] sm:$0xff]
        %v386 = vld [vmem:[#allocation2 + $0x690] sm:$0xff]
        %v387 = vld [vmem:[#allocation2 + $0x698] sm:$0xff]
        %v388 = vld [vmem:[#allocation2 + $0x6a0] sm:$0xff]
        %v389 = vld [vmem:[#allocation2 + $0x6a8] sm:$0xff]
        %v390 = vld [vmem:[#allocation2 + $0x6b0] sm:$0xff]
        %v391 = vld [vmem:[#allocation2 + $0x6b8] sm:$0xff]
        %v392 = vld [vmem:[#allocation2 + $0x6c0] sm:$0xff]
        %v393 = vld [vmem:[#allocation2 + $0x6c8] sm:$0xff]
        %v394 = vld [vmem:[#allocation2 + $0x6d0] sm:$0xff]
        %v395 = vld [vmem:[#allocation2 + $0x6d8] sm:$0xff]
        %v396 = vld [vmem:[#allocation2 + $0x6e0] sm:$0xff]
        %v397 = vld [vmem:[#allocation2 + $0x6e8] sm:$0xff]
        %v398 = vld [vmem:[#allocation2 + $0x6f0] sm:$0xff]
        %v399 = vld [vmem:[#allocation2 + $0x6f8] sm:$0xff]
        %v400 = vld [vmem:[#allocation2 + $0x700] sm:$0xff]
        %v401 = vld [vmem:[#allocation2 + $0x708] sm:$0xff]
        %v402 = vld [vmem:[#allocation2 + $0x710] sm:$0xff]
        %v403 = vld [vmem:[#allocation2 + $0x718] sm:$0xff]
        %v404 = vld [vmem:[#allocation2 + $0x720] sm:$0xff]
        %v405 = vld [vmem:[#allocation2 + $0x728] sm:$0xff]
        %v406 = vld [vmem:[#allocation2 + $0x730] sm:$0xff]
        %v407 = vld [vmem:[#allocation2 + $0x738] sm:$0xff]
        %v408 = vld [vmem:[#allocation2 + $0x740] sm:$0xff]
        %v409 = vld [vmem:[#allocation2 + $0x748] sm:$0xff]
        %v410 = vld [vmem:[#allocation2 + $0x750] sm:$0xff]
        %v411 = vld [vmem:[#allocation2 + $0x758] sm:$0xff]
        %v412 = vld [vmem:[#allocation2 + $0x760] sm:$0xff]
        %v413 = vld [vmem:[#allocation2 + $0x768] sm:$0xff]
        %v414 = vld [vmem:[#allocation2 + $0x770] sm:$0xff]
        %v415 = vld [vmem:[#allocation2 + $0x778] sm:$0xff]
        %v416 = vld [vmem:[#allocation2 + $0x780] sm:$0xff]
        %v417 = vld [vmem:[#allocation2 + $0x788] sm:$0xff]
        %v418 = vld [vmem:[#allocation2 + $0x790] sm:$0xff]
        %v419 = vld [vmem:[#allocation2 + $0x798] sm:$0xff]
        %v420 = vld [vmem:[#allocation2 + $0x7a0] sm:$0xff]
        %v421 = vld [vmem:[#allocation2 + $0x7a8] sm:$0xff]
        %v422 = vld [vmem:[#allocation2 + $0x7b0] sm:$0xff]
        %v423 = vld [vmem:[#allocation2 + $0x7b8] sm:$0xff]
        %v424 = vld [vmem:[#allocation2 + $0x7c0] sm:$0xff]
        %v425 = vld [vmem:[#allocation2 + $0x7c8] sm:$0xff]
        %v426 = vld [vmem:[#allocation2 + $0x7d0] sm:$0xff]
        %v427 = vld [vmem:[#allocation2 + $0x7d8] sm:$0xff]
        %v428 = vld [vmem:[#allocation2 + $0x7e0] sm:$0xff]
        %v429 = vld [vmem:[#allocation2 + $0x7e8] sm:$0xff]
        %v430 = vld [vmem:[#allocation2 + $0x7f0] sm:$0xff]
        %v431 = vld [vmem:[#allocation2 + $0x7f8] sm:$0xff]
        %432 = vmatprep.subr.mxu0 %v177
        %433 = vmatpush1.msra.mxu0 %v176
        %434 = vmatprep.subr.mxu0 %v185
        %435 = vmatpush1.msra.mxu0 %v184
        %436 = vmatprep.subr.mxu0 %v193
        %437 = vmatpush1.msra.mxu0 %v192
        %438 = vmatprep.subr.mxu0 %v201
        %439 = vmatpush1.msra.mxu0 %v200
        %440 = vmatprep.subr.mxu0 %v209
        %441 = vmatpush1.msra.mxu0 %v208
        %442 = vmatprep.subr.mxu0 %v217
        %443 = vmatpush1.msra.mxu0 %v216
        %444 = vmatprep.subr.mxu0 %v225
        %445 = vmatpush1.msra.mxu0 %v224
        %446 = vmatprep.subr.mxu0 %v233
        %447 = vmatpush1.msra.mxu0 %v232
        %448 = vmatprep.subr.mxu0 %v241
        %449 = vmatpush1.msra.mxu0 %v240
        %450 = vmatprep.subr.mxu0 %v249
        %451 = vmatpush1.msra.mxu0 %v248
        %452 = vmatprep.subr.mxu0 %v257
        %453 = vmatpush1.msra.mxu0 %v256
        %454 = vmatprep.subr.mxu0 %v265
        %455 = vmatpush1.msra.mxu0 %v264
        %456 = vmatprep.subr.mxu0 %v273
        %457 = vmatpush1.msra.mxu0 %v272
        %458 = vmatprep.subr.mxu0 %v281
        %459 = vmatpush1.msra.mxu0 %v280
        %460 = vmatprep.subr.mxu0 %v289
        %461 = vmatpush1.msra.mxu0 %v288
        %462 = vmatprep.subr.mxu0 %v297
        %463 = vmatpush1.msra.mxu0 %v296
        %464 = vmatprep.subr.mxu0 %v305
        %465 = vmatpush1.msra.mxu0 %v304
        %466 = vmatprep.subr.mxu0 %v313
        %467 = vmatpush1.msra.mxu0 %v312
        %468 = vmatprep.subr.mxu0 %v321
        %469 = vmatpush1.msra.mxu0 %v320
        %470 = vmatprep.subr.mxu0 %v329
        %471 = vmatpush1.msra.mxu0 %v328
        %472 = vmatprep.subr.mxu0 %v337
        %473 = vmatpush1.msra.mxu0 %v336
        %474 = vmatprep.subr.mxu0 %v345
        %475 = vmatpush1.msra.mxu0 %v344
        %476 = vmatprep.subr.mxu0 %v353
        %477 = vmatpush1.msra.mxu0 %v352
        %478 = vmatprep.subr.mxu0 %v361
        %479 = vmatpush1.msra.mxu0 %v360
        %480 = vmatprep.subr.mxu0 %v369
        %481 = vmatpush1.msra.mxu0 %v368
        %482 = vmatprep.subr.mxu0 %v377
        %483 = vmatpush1.msra.mxu0 %v376
        %484 = vmatprep.subr.mxu0 %v385
        %485 = vmatpush1.msra.mxu0 %v384
        %486 = vmatprep.subr.mxu0 %v393
        %487 = vmatpush1.msra.mxu0 %v392
        %488 = vmatprep.subr.mxu0 %v401
        %489 = vmatpush1.msra.mxu0 %v400
        %490 = vmatprep.subr.mxu0 %v409
        %491 = vmatpush1.msra.mxu0 %v408
        %492 = vmatprep.subr.mxu0 %v417
        %493 = vmatpush1.msra.mxu0 %v416
        %494 = vmatprep.subr.mxu0 %v425
        %495 = vmatpush1.msra.mxu0 %v424
        %496 = vmatprep.mubr.f32.mxu0 %v175
        %497 = vmatmul.mubr.f32.gmra.mrb[0].mxu0 %v168
        %v498 = vpop.f32.mrb[0].mxu0
        %v499 = vadd.f32 0.0, %v498
        %v500 = vpop.f32.mrb[0].mxu0
        %v501 = vadd.f32 0.0, %v500
        %502 = vdwg.mxu0
        %503 = vmatprep.subr.mxu0 %v179
        %504 = vmatpush1.msra.mxu0 %v178
        %505 = vmatprep.subr.mxu0 %v187
        %506 = vmatpush1.msra.mxu0 %v186
        %507 = vmatprep.subr.mxu0 %v195
        %508 = vmatpush1.msra.mxu0 %v194
        %509 = vmatprep.subr.mxu0 %v203
        %510 = vmatpush1.msra.mxu0 %v202
        %511 = vmatprep.subr.mxu0 %v211
        %512 = vmatpush1.msra.mxu0 %v210
        %513 = vmatprep.subr.mxu0 %v219
        %514 = vmatpush1.msra.mxu0 %v218
        %515 = vmatprep.subr.mxu0 %v227
        %516 = vmatpush1.msra.mxu0 %v226
        %517 = vmatprep.subr.mxu0 %v235
        %518 = vmatpush1.msra.mxu0 %v234
        %519 = vmatprep.subr.mxu0 %v243
        %520 = vmatpush1.msra.mxu0 %v242
        %521 = vmatprep.subr.mxu0 %v251
        %522 = vmatpush1.msra.mxu0 %v250
        %523 = vmatprep.subr.mxu0 %v259
        %524 = vmatpush1.msra.mxu0 %v258
        %525 = vmatprep.subr.mxu0 %v267
        %526 = vmatpush1.msra.mxu0 %v266
        %527 = vmatprep.subr.mxu0 %v275
        %528 = vmatpush1.msra.mxu0 %v274
        %529 = vmatprep.subr.mxu0 %v283
        %530 = vmatpush1.msra.mxu0 %v282
        %531 = vmatprep.subr.mxu0 %v291
        %532 = vmatpush1.msra.mxu0 %v290
        %533 = vmatprep.subr.mxu0 %v299
        %534 = vmatpush1.msra.mxu0 %v298
        %535 = vmatprep.subr.mxu0 %v307
        %536 = vmatpush1.msra.mxu0 %v306
        %537 = vmatprep.subr.mxu0 %v315
        %538 = vmatpush1.msra.mxu0 %v314
        %539 = vmatprep.subr.mxu0 %v323
        %540 = vmatpush1.msra.mxu0 %v322
        %541 = vmatprep.subr.mxu0 %v331
        %542 = vmatpush1.msra.mxu0 %v330
        %543 = vmatprep.subr.mxu0 %v339
        %544 = vmatpush1.msra.mxu0 %v338
        %545 = vmatprep.subr.mxu0 %v347
        %546 = vmatpush1.msra.mxu0 %v346
        %547 = vmatprep.subr.mxu0 %v355
        %548 = vmatpush1.msra.mxu0 %v354
        %549 = vmatprep.subr.mxu0 %v363
        %550 = vmatpush1.msra.mxu0 %v362
        %551 = vmatprep.subr.mxu0 %v371
        %552 = vmatpush1.msra.mxu0 %v370
        %553 = vmatprep.subr.mxu0 %v379
        %554 = vmatpush1.msra.mxu0 %v378
        %555 = vmatprep.subr.mxu0 %v387
        %556 = vmatpush1.msra.mxu0 %v386
        %557 = vmatprep.subr.mxu0 %v395
        %558 = vmatpush1.msra.mxu0 %v394
        %559 = vmatprep.subr.mxu0 %v403
        %560 = vmatpush1.msra.mxu0 %v402
        %561 = vmatprep.subr.mxu0 %v411
        %562 = vmatpush1.msra.mxu0 %v410
        %563 = vmatprep.subr.mxu0 %v419
        %564 = vmatpush1.msra.mxu0 %v418
        %565 = vmatprep.subr.mxu0 %v427
        %566 = vmatpush1.msra.mxu0 %v426
        %567 = vmatprep.mubr.f32.mxu0 %v175
        %568 = vmatmul.mubr.f32.gmra.mrb[0].mxu0 %v168
        %v569 = vpop.f32.mrb[0].mxu0
        %v570 = vadd.f32 0.0, %v569
        %v571 = vpop.f32.mrb[0].mxu0
        %v572 = vadd.f32 0.0, %v571
        %573 = vdwg.mxu0
        %574 = vmatprep.subr.mxu0 %v181
        %575 = vmatpush1.msra.mxu0 %v180
        %576 = vmatprep.subr.mxu0 %v189
        %577 = vmatpush1.msra.mxu0 %v188
        %578 = vmatprep.subr.mxu0 %v197
        %579 = vmatpush1.msra.mxu0 %v196
        %580 = vmatprep.subr.mxu0 %v205
        %581 = vmatpush1.msra.mxu0 %v204
        %582 = vmatprep.subr.mxu0 %v213
        %583 = vmatpush1.msra.mxu0 %v212
        %584 = vmatprep.subr.mxu0 %v221
        %585 = vmatpush1.msra.mxu0 %v220
        %586 = vmatprep.subr.mxu0 %v229
        %587 = vmatpush1.msra.mxu0 %v228
        %588 = vmatprep.subr.mxu0 %v237
        %589 = vmatpush1.msra.mxu0 %v236
        %590 = vmatprep.subr.mxu0 %v245
        %591 = vmatpush1.msra.mxu0 %v244
        %592 = vmatprep.subr.mxu0 %v253
        %593 = vmatpush1.msra.mxu0 %v252
        %594 = vmatprep.subr.mxu0 %v261
        %595 = vmatpush1.msra.mxu0 %v260
        %596 = vmatprep.subr.mxu0 %v269
        %597 = vmatpush1.msra.mxu0 %v268
        %598 = vmatprep.subr.mxu0 %v277
        %599 = vmatpush1.msra.mxu0 %v276
        %600 = vmatprep.subr.mxu0 %v285
        %601 = vmatpush1.msra.mxu0 %v284
        %602 = vmatprep.subr.mxu0 %v293
        %603 = vmatpush1.msra.mxu0 %v292
        %604 = vmatprep.subr.mxu0 %v301
        %605 = vmatpush1.msra.mxu0 %v300
        %606 = vmatprep.subr.mxu0 %v309
        %607 = vmatpush1.msra.mxu0 %v308
        %608 = vmatprep.subr.mxu0 %v317
        %609 = vmatpush1.msra.mxu0 %v316
        %610 = vmatprep.subr.mxu0 %v325
        %611 = vmatpush1.msra.mxu0 %v324
        %612 = vmatprep.subr.mxu0 %v333
        %613 = vmatpush1.msra.mxu0 %v332
        %614 = vmatprep.subr.mxu0 %v341
        %615 = vmatpush1.msra.mxu0 %v340
        %616 = vmatprep.subr.mxu0 %v349
        %617 = vmatpush1.msra.mxu0 %v348
        %618 = vmatprep.subr.mxu0 %v357
        %619 = vmatpush1.msra.mxu0 %v356
        %620 = vmatprep.subr.mxu0 %v365
        %621 = vmatpush1.msra.mxu0 %v364
        %622 = vmatprep.subr.mxu0 %v373
        %623 = vmatpush1.msra.mxu0 %v372
        %624 = vmatprep.subr.mxu0 %v381
        %625 = vmatpush1.msra.mxu0 %v380
        %626 = vmatprep.subr.mxu0 %v389
        %627 = vmatpush1.msra.mxu0 %v388
        %628 = vmatprep.subr.mxu0 %v397
        %629 = vmatpush1.msra.mxu0 %v396
        %630 = vmatprep.subr.mxu0 %v405
        %631 = vmatpush1.msra.mxu0 %v404
        %632 = vmatprep.subr.mxu0 %v413
        %633 = vmatpush1.msra.mxu0 %v412
        %634 = vmatprep.subr.mxu0 %v421
        %635 = vmatpush1.msra.mxu0 %v420
        %636 = vmatprep.subr.mxu0 %v429
        %637 = vmatpush1.msra.mxu0 %v428
        %638 = vmatprep.mubr.f32.mxu0 %v175
        %639 = vmatmul.mubr.f32.gmra.mrb[0].mxu0 %v168
        %v640 = vpop.f32.mrb[0].mxu0
        %v641 = vadd.f32 0.0, %v640
        %v642 = vpop.f32.mrb[0].mxu0
        %v643 = vadd.f32 0.0, %v642
        %644 = vdwg.mxu0
        %645 = vmatprep.subr.mxu0 %v183
        %646 = vmatpush1.msra.mxu0 %v182
        %647 = vmatprep.subr.mxu0 %v191
        %648 = vmatpush1.msra.mxu0 %v190
        %649 = vmatprep.subr.mxu0 %v199
        %650 = vmatpush1.msra.mxu0 %v198
        %651 = vmatprep.subr.mxu0 %v207
        %652 = vmatpush1.msra.mxu0 %v206
        %653 = vmatprep.subr.mxu0 %v215
        %654 = vmatpush1.msra.mxu0 %v214
        %655 = vmatprep.subr.mxu0 %v223
        %656 = vmatpush1.msra.mxu0 %v222
        %657 = vmatprep.subr.mxu0 %v231
        %658 = vmatpush1.msra.mxu0 %v230
        %659 = vmatprep.subr.mxu0 %v239
        %660 = vmatpush1.msra.mxu0 %v238
        %661 = vmatprep.subr.mxu0 %v247
        %662 = vmatpush1.msra.mxu0 %v246
        %663 = vmatprep.subr.mxu0 %v255
        %664 = vmatpush1.msra.mxu0 %v254
        %665 = vmatprep.subr.mxu0 %v263
        %666 = vmatpush1.msra.mxu0 %v262
        %667 = vmatprep.subr.mxu0 %v271
        %668 = vmatpush1.msra.mxu0 %v270
        %669 = vmatprep.subr.mxu0 %v279
        %670 = vmatpush1.msra.mxu0 %v278
        %671 = vmatprep.subr.mxu0 %v287
        %672 = vmatpush1.msra.mxu0 %v286
        %673 = vmatprep.subr.mxu0 %v295
        %674 = vmatpush1.msra.mxu0 %v294
        %675 = vmatprep.subr.mxu0 %v303
        %676 = vmatpush1.msra.mxu0 %v302
        %677 = vmatprep.subr.mxu0 %v311
        %678 = vmatpush1.msra.mxu0 %v310
        %679 = vmatprep.subr.mxu0 %v319
        %680 = vmatpush1.msra.mxu0 %v318
        %681 = vmatprep.subr.mxu0 %v327
        %682 = vmatpush1.msra.mxu0 %v326
        %683 = vmatprep.subr.mxu0 %v335
        %684 = vmatpush1.msra.mxu0 %v334
        %685 = vmatprep.subr.mxu0 %v343
        %686 = vmatpush1.msra.mxu0 %v342
        %687 = vmatprep.subr.mxu0 %v351
        %688 = vmatpush1.msra.mxu0 %v350
        %689 = vmatprep.subr.mxu0 %v359
        %690 = vmatpush1.msra.mxu0 %v358
        %691 = vmatprep.subr.mxu0 %v367
        %692 = vmatpush1.msra.mxu0 %v366
        %693 = vmatprep.subr.mxu0 %v375
        %694 = vmatpush1.msra.mxu0 %v374
        %695 = vmatprep.subr.mxu0 %v383
        %696 = vmatpush1.msra.mxu0 %v382
        %697 = vmatprep.subr.mxu0 %v391
        %698 = vmatpush1.msra.mxu0 %v390
        %699 = vmatprep.subr.mxu0 %v399
        %700 = vmatpush1.msra.mxu0 %v398
        %701 = vmatprep.subr.mxu0 %v407
        %702 = vmatpush1.msra.mxu0 %v406
        %703 = vmatprep.subr.mxu0 %v415
        %704 = vmatpush1.msra.mxu0 %v414
        %705 = vmatprep.subr.mxu0 %v423
        %706 = vmatpush1.msra.mxu0 %v422
        %707 = vmatprep.subr.mxu0 %v431
        %708 = vmatpush1.msra.mxu0 %v430
        %709 = vmatprep.mubr.f32.mxu0 %v175
        %710 = vmatmul.mubr.f32.gmra.mrb[0].mxu0 %v168
        %v711 = vpop.f32.mrb[0].mxu0
        %v712 = vadd.f32 0.0, %v711
        %v713 = vpop.f32.mrb[0].mxu0
        %v714 = vadd.f32 0.0, %v713
        %715 = vdwg.mxu0
        %v724 = vcombine.low %v499, %v501
        %v725 = vcombine.low %v570, %v572
        %v726 = vcombine.low %v641, %v643
        %v727 = vcombine.low %v712, %v714
        %v729 = vunpack.c.l.s4 1966171168
        %v730 = vunpack.c.0.s8 %v729
        %v731 = vlaneseq
        %v732 = vshrl.u32 %v731, 7
        %v733 = vsub.s32 %v730, %v732
        %v734 = vrot.slane %v724, %v733
        %v736 = vunpack.c.l.s4 1966171168
        %v737 = vunpack.c.0.s8 %v736
        %v738 = vlaneseq
        %v739 = vshrl.u32 %v738, 7
        %v740 = vsub.s32 %v737, %v739
        %v741 = vrot.slane %v725, %v740
        %v743 = vunpack.c.l.s4 1966171168
        %v744 = vunpack.c.0.s8 %v743
        %v745 = vlaneseq
        %v746 = vshrl.u32 %v745, 7
        %v747 = vsub.s32 %v744, %v746
        %v748 = vrot.slane %v726, %v747
        %v750 = vunpack.c.l.s4 1966171168
        %v751 = vunpack.c.0.s8 %v750
        %v752 = vlaneseq
        %v753 = vshrl.u32 %v752, 7
        %v754 = vsub.s32 %v751, %v753
        %v755 = vrot.slane %v727, %v754
        %v756 = vcombine.low %v734, %v741
        %v757 = vcombine.low %v748, %v755
        %v759 = vunpack.c.l.s4 1966171168
        %v760 = vunpack.c.0.s8 %v759
        %v761 = vlaneseq
        %v762 = vshrl.u32 %v761, 7
        %v763 = vsub.s32 %v760, %v762
        %v764 = vrot.slane %v756, %v763
        %v766 = vunpack.c.l.s4 1966171168
        %v767 = vunpack.c.0.s8 %v766
        %v768 = vlaneseq
        %v769 = vshrl.u32 %v768, 7
        %v770 = vsub.s32 %v767, %v769
        %v771 = vrot.slane %v757, %v770
        %v772 = vcombine.low %v764, %v771
        %774 = vst [vmem:[%s156] sm:$0xff] %v772
        %p775 = scmp.lt.s32.totalorder %s14, 1
        %s776 = scalar_select %p775, %s14, 1
        %s777 = smul.addr %s776, 8
        %s778 = scalar_lea.vmem %s2, %s777
        // Predicated region
        $region33: #{classified_cost_volume_epistemic.1} parent=27 // pred_check
          %p779 = pneg %p79
        $region34: #{classified_cost_volume_epistemic.1} parent=27 // pred_check_branch
          %781 = sbr.rel (%p779) target = $region36
        $region35: #{classified_cost_volume_epistemic.1} parent=27 // pred_region
          _
        $region36: #{classified_cost_volume_epistemic.1} parent=27 // pred_fallthru
          _
      $region28: #{classified_cost_volume_epistemic.1} parent=5 // pred_fallthru
        _
      %p782 = scmp.le.s32.totalorder 2, %s9
      // Predicated region
      $region37: #{classified_cost_volume_epistemic.1} parent=5 // pred_check
        %p783 = pneg %p782
      $region38: #{classified_cost_volume_epistemic.1} parent=5 // pred_check_branch
        %785 = sbr.rel (%p783) target = $region40
      $region39: #{classified_cost_volume_epistemic.1} parent=5 // pred_region
        %s786 = ssub.s32 %s9, 2
        // Predicated region
        $region41: #{classified_cost_volume_epistemic.1} parent=39 // pred_check
          %p787 = pneg %p85
        $region42: #{classified_cost_volume_epistemic.1} parent=39 // pred_check_branch
          %789 = sbr.rel (%p787) target = $region44
        $region43: #{classified_cost_volume_epistemic.1} parent=39 // pred_region
          %p790 = scmp.lt.s32.totalorder %s15, 1
          %s791 = scalar_select %p790, %s15, 1
          %s792 = smul.addr %s791, 8
          %s793 = scalar_lea.vmem %s2, %s792
        $region44: #{classified_cost_volume_epistemic.1} parent=39 // pred_fallthru
          _
      $region40: #{classified_cost_volume_epistemic.1} parent=5 // pred_fallthru
        _
    $region6: #{classified_cost_volume_epistemic.1} parent=1 // loop_footer
      %s13 = sadd.s32 1, %s9
    $region7: #{classified_cost_volume_epistemic.1} parent=1 // loop_footer_branch
      %8 = sbr.rel target = $region3
    $region8: #{classified_cost_volume_epistemic.1} parent=1 // loop_exit
      _
    %794 = vsyncpa [#allocation3], 1
    %s795 = scalar_lea.sflag [#allocation3], 1
    %796 = vsyncpa %s795, 1

</llo_original>
